<compile_context>
chip_gen: v7x
topology: tpu7x:2x2x1
jax: 0.10.0
libtpu: 0.0.40
codegen_flags: <defaults>
</compile_context>

<pallas_src>
import numpy as np
import jax
import jax.numpy as jnp
from jax.experimental import pallas as pl
from jax.experimental.pallas import tpu as pltpu

KSIZES = (1, 2, 3, 4)        # the four conv branches of ConvBlock
MAXK = 4
PAD_LO = (MAXK - 1) // 2     # = 1 : low-side pad of the unified 4x4 window
PAD_HI = MAXK // 2           # = 2 : high-side pad


def _convblock_kernel(x_ref, w_ref, b_ref, o_ref):
    """Fused ConvBlock for one batch tile.

    x_ref : (TB, Hp, Kp)        bf16  padded rows, width*Cin folded into lanes
    w_ref : (4, Kp, W*Cout)     bf16  folded weight  (grid-invariant, resident)
    b_ref : (1, W*Cout)         f32   bias tiled over width (grid-invariant)
    o_ref : (TB*H, W*Cout)      f32   output rows, width*Cout folded into lanes

    out[b, h, w*Cout+o] = bias[o]
        + sum_si  x_ref[b, h+si, :] @ w_ref[si]      (W-shifts + Cin are in w_ref)
    """
    tb, _hp, k = x_ref.shape
    m, _nout = o_ref.shape
    h = m // tb
    acc = jnp.zeros(o_ref.shape, jnp.float32)
    for si in range(MAXK):                                   # 4 static taps, unrolled
        xs = x_ref[:, pl.ds(si, h), :].reshape(m, k)         # sublane-shifted rows
        acc = acc + jnp.dot(xs, w_ref[si], preferred_element_type=jnp.float32)
    o_ref[...] = (acc + b_ref[...]).astype(o_ref.dtype)      # single lane-dense store


def conv_block_nhwc(x_nhwc, wfold, bias_row, *, rows_per_step=1024):
    """ConvBlock forward, NHWC in -> NHWC out (the fast path)."""
    N, H, W, C = x_nhwc.shape
    _, k_pad, w_cout = wfold.shape
    cout = w_cout // W
    Hp = H + MAXK - 1
    Wp = W + MAXK - 1

    # bf16 data path: halves the streamed input bytes; MXU accumulates in f32.
    x = x_nhwc.astype(jnp.bfloat16)
    xp = jnp.pad(x, ((0, 0), (PAD_LO, PAD_HI), (PAD_LO, PAD_HI), (0, 0)))
    xp = xp.reshape(N, Hp, Wp * C)                       # width+chan -> lane dim
    if k_pad > Wp * C:                                   # lane pad to match weight
        xp = jnp.pad(xp, ((0, 0), (0, 0), (0, k_pad - Wp * C)))

    # ---- batch tiling: ~rows_per_step output rows per grid step (amortize the
    # ~0.35us/step overhead), bounded by a v7x-safe VMEM budget, even grid so
    # both v7x TensorCores get the same share of steps.
    tb = max(1, min(N, max(1, rows_per_step // H)))
    if H % 8 != 0:
        tb = N                       # keep block dims == full dims (layout rule)

    w_bytes = wfold.size * 2 + w_cout * 4                # resident weight + bias (once)

    def step_bytes(t):               # double-buffered streamed blocks + resident weight
        return 2 * (t * Hp * k_pad * 2 + t * H * w_cout * 4) + w_bytes

    while tb > 1 and step_bytes(tb) > (40 << 20):        # stay well under 48MiB (v7x)
        tb = (tb + 1) // 2
    if N > 1 and H % 8 == 0:
        n_tiles = pl.cdiv(N, tb)
        if n_tiles % 2 == 1:                             # even grid for v7x's 2 TCs
            tb = pl.cdiv(N, n_tiles + 1)
    n_tiles = pl.cdiv(N, tb)
    n_pad = n_tiles * tb
    if n_pad != N:
        xp = jnp.pad(xp, ((0, n_pad - N), (0, 0), (0, 0)))

    vmem_bytes = min(step_bytes(tb) + (4 << 20), 48 << 20)

    out2d = pl.pallas_call(
        _convblock_kernel,
        out_shape=jax.ShapeDtypeStruct((n_pad * H, w_cout), jnp.float32),
        grid_spec=pltpu.PrefetchScalarGridSpec(
            num_scalar_prefetch=0,
            grid=(n_tiles,),
            in_specs=[
                pl.BlockSpec((tb, Hp, k_pad), lambda i: (i, 0, 0)),      # streamed
                pl.BlockSpec((MAXK, k_pad, w_cout), lambda i: (0, 0, 0)),  # invariant
                pl.BlockSpec((1, w_cout), lambda i: (0, 0)),               # invariant
            ],
            out_specs=pl.BlockSpec((tb * H, w_cout), lambda i: (i, 0)),
        ),
        compiler_params=pltpu.CompilerParams(
            dimension_semantics=("parallel",),
            vmem_limit_bytes=vmem_bytes,
        ),
    )(xp, wfold, bias_row)

    # Row-major reinterpretation only: (n*H + h, w*cout + o) -> (n, h, w, o).
    return out2d[:N * H].reshape(N, H, W, cout)


def conv_block_forward_nchw(x_nchw, wfold, bias_row):
    """PyTorch-layout entry point.  In a real model keep activations NHWC and
    call conv_block_nhwc directly; these transposes belong at the model boundary."""
    x = jnp.transpose(x_nchw, (0, 2, 3, 1))
    y = conv_block_nhwc(x, wfold, bias_row)
    return jnp.transpose(y, (0, 3, 1, 2))


def init_params(key, input_dim, output_dim):
    """Deterministic init mimicking nn.Conv2d defaults (uniform +/- 1/sqrt(fan_in))."""
    d = output_dim // 4
    weights, biases = [], []
    for k in KSIZES:
        key, kw, kb = jax.random.split(key, 3)
        fan_in = input_dim * k * k
        bound = 1.0 / (fan_in ** 0.5)
        weights.append(jax.random.uniform(
            kw, (k, k, input_dim, d), jnp.float32, -bound, bound))        # HWIO
        biases.append(jax.random.uniform(kb, (d,), jnp.float32, -bound, bound))
    return weights, biases


def pack_folded_params(weights, biases, input_dim, output_dim, width):
    """Pack the 4 branches into the kernel's folded weight / bias.

    Step 1: pack into one 4x4 'same' conv weight wpack[si, sj, c, o] whose output
            channels are the branch concatenation (torch 'same': pad (k-1)//2
            before, k//2 after -> window offset s0 = PAD_LO - (k-1)//2).
    Step 2: fold the W-shift (sj) and the Cin contraction into a block-structured
            matrix per H-shift si:  wfold[si][(w+sj)*C + c, w*cout + o] = wpack[si,sj,c,o]
            so the conv over one padded row is a single (Kp)x(W*cout) matmul.
    """
    d = output_dim // 4
    cout = 4 * d
    C = input_dim
    Wp = width + MAXK - 1

    wpack = np.zeros((MAXK, MAXK, C, cout), np.float32)
    for bi, (k, w) in enumerate(zip(KSIZES, weights)):
        s0 = PAD_LO - (k - 1) // 2
        wpack[s0:s0 + k, s0:s0 + k, :, bi * d:(bi + 1) * d] = np.asarray(w)

    k_raw = Wp * C
    k_pad = ((k_raw + 15) // 16) * 16          # bf16 sublane-granule friendly K
    wfold = np.zeros((MAXK, k_pad, width * cout), np.float32)
    for si in range(MAXK):
        for sj in range(MAXK):
            for w0 in range(width):
                r0 = (w0 + sj) * C
                c0 = w0 * cout
                wfold[si, r0:r0 + C, c0:c0 + cout] += wpack[si, sj]

    bias_row = np.tile(np.concatenate([np.asarray(b) for b in biases]), width)[None, :]
    return jnp.asarray(wfold, jnp.bfloat16), jnp.asarray(bias_row, jnp.float32)


def reference(x_nchw, weights, biases):
    """Pure-JAX reference matching PyTorch Conv2d(padding='same') + cat(dim=1)."""
    outs = []
    for k, w, b in zip(KSIZES, weights, biases):
        pad_before, pad_after = (k - 1) // 2, k // 2
        o = jax.lax.conv_general_dilated(
            x_nchw.astype(jnp.float32), w, window_strides=(1, 1),
            padding=[(pad_before, pad_after), (pad_before, pad_after)],
            dimension_numbers=("NCHW", "HWIO", "NCHW"))
        outs.append(o + b[None, :, None, None])
    return jnp.concatenate(outs, axis=1)


if __name__ == "__main__":
    key = jax.random.PRNGKey(0)
    kx, kp = jax.random.split(key)
    N, C_IN, H, W = 2, 4, 16, 16
    OUTPUT_DIM = 16                          # -> d = 4 channels per branch
    x = jax.random.normal(kx, (N, C_IN, H, W), jnp.float32)   # NCHW like PyTorch

    weights, biases = init_params(kp, C_IN, OUTPUT_DIM)
    wfold, brow = pack_folded_params(weights, biases, C_IN, OUTPUT_DIM, W)

    fwd = jax.jit(lambda a: conv_block_forward_nchw(a, wfold, brow))
    out = jax.block_until_ready(fwd(x))

    # Reference on the same bf16-quantized inputs/weights (kernel data path is
    # bf16 with f32 accumulation); the one-time bf16 quantization is the only
    # deviation from the f32 PyTorch module (flagged for downstream consumers).
    xq = x.astype(jnp.bfloat16).astype(jnp.float32)
    wq = [w.astype(jnp.bfloat16).astype(jnp.float32) for w in weights]
    ref = jax.block_until_ready(reference(xq, wq, biases))

    assert out.shape == (N, OUTPUT_DIM, H, W), out.shape
    err = float(jnp.max(jnp.abs(out - ref)))
    assert jnp.allclose(out, ref, atol=1e-3, rtol=1e-3), err
    print("KERNEL_OK")
</pallas_src>

<mosaic_0001>
module attributes {stable_mosaic.version = 11 : i64} {
  func.func @_convblock_kernel(%arg0: i32, %arg1: memref<1x19x80xbf16, #tpu.memory_space<vmem>>, %arg2: memref<4x80x256xbf16, #tpu.memory_space<vmem>>, %arg3: memref<1x256xf32, #tpu.memory_space<vmem>>, %arg4: memref<16x256xf32, #tpu.memory_space<vmem>>) attributes {dimension_semantics = [#tpu.dimension_semantics<parallel>], iteration_bounds = array<i64: 2>, scalar_prefetch = 0 : i64, scratch_operands = 0 : i64, tpu.core_type = #tpu.core_type<tc>, window_params = [{transform_indices = @transform_0, window_bounds = array<i64: 1, 19, 80>}, {pipeline_mode = #tpu.pipeline_mode<synchronous>, transform_indices = @transform_1, window_bounds = array<i64: 4, 80, 256>}, {pipeline_mode = #tpu.pipeline_mode<synchronous>, transform_indices = @transform_2, window_bounds = array<i64: 1, 256>}, {transform_indices = @transform_3, window_bounds = array<i64: 16, 256>}]} {
    %cst = arith.constant 0.000000e+00 : f32
    %0 = vector.broadcast %cst : f32 to vector<16x256xf32>
    %c0 = arith.constant 0 : index
    %c0_0 = arith.constant 0 : index
    %c0_1 = arith.constant 0 : index
    %1 = vector.load %arg1[%c0, %c0_0, %c0_1] : memref<1x19x80xbf16, #tpu.memory_space<vmem>>, vector<1x16x80xbf16>
    %2 = vector.shape_cast %1 : vector<1x16x80xbf16> to vector<16x80xbf16>
    %c0_2 = arith.constant 0 : index
    %c0_3 = arith.constant 0 : index
    %c0_4 = arith.constant 0 : index
    %3 = vector.load %arg2[%c0_2, %c0_3, %c0_4] : memref<4x80x256xbf16, #tpu.memory_space<vmem>>, vector<1x80x256xbf16>
    %4 = vector.shape_cast %3 : vector<1x80x256xbf16> to vector<80x256xbf16>
    %cst_5 = arith.constant dense<0.000000e+00> : vector<16x256xf32>
    %5 = tpu.matmul %2, %4, %cst_5 {dimension_numbers = #tpu.dot_dimension_numbers<[1], [0], [0], [1], [0, 0, 1, 1], [], []>} : vector<16x80xbf16>, vector<80x256xbf16>, vector<16x256xf32> -> vector<16x256xf32>
    %6 = arith.addf %0, %5 : vector<16x256xf32>
    %c0_6 = arith.constant 0 : index
    %c1 = arith.constant 1 : index
    %c0_7 = arith.constant 0 : index
    %7 = vector.load %arg1[%c0_6, %c1, %c0_7] : memref<1x19x80xbf16, #tpu.memory_space<vmem>>, vector<1x16x80xbf16>
    %8 = vector.shape_cast %7 : vector<1x16x80xbf16> to vector<16x80xbf16>
    %c1_8 = arith.constant 1 : index
    %c0_9 = arith.constant 0 : index
    %c0_10 = arith.constant 0 : index
    %9 = vector.load %arg2[%c1_8, %c0_9, %c0_10] : memref<4x80x256xbf16, #tpu.memory_space<vmem>>, vector<1x80x256xbf16>
    %10 = vector.shape_cast %9 : vector<1x80x256xbf16> to vector<80x256xbf16>
    %cst_11 = arith.constant dense<0.000000e+00> : vector<16x256xf32>
    %11 = tpu.matmul %8, %10, %cst_11 {dimension_numbers = #tpu.dot_dimension_numbers<[1], [0], [0], [1], [0, 0, 1, 1], [], []>} : vector<16x80xbf16>, vector<80x256xbf16>, vector<16x256xf32> -> vector<16x256xf32>
    %12 = arith.addf %6, %11 : vector<16x256xf32>
    %c0_12 = arith.constant 0 : index
    %c2 = arith.constant 2 : index
    %c0_13 = arith.constant 0 : index
    %13 = vector.load %arg1[%c0_12, %c2, %c0_13] : memref<1x19x80xbf16, #tpu.memory_space<vmem>>, vector<1x16x80xbf16>
    %14 = vector.shape_cast %13 : vector<1x16x80xbf16> to vector<16x80xbf16>
    %c2_14 = arith.constant 2 : index
    %c0_15 = arith.constant 0 : index
    %c0_16 = arith.constant 0 : index
    %15 = vector.load %arg2[%c2_14, %c0_15, %c0_16] : memref<4x80x256xbf16, #tpu.memory_space<vmem>>, vector<1x80x256xbf16>
    %16 = vector.shape_cast %15 : vector<1x80x256xbf16> to vector<80x256xbf16>
    %cst_17 = arith.constant dense<0.000000e+00> : vector<16x256xf32>
    %17 = tpu.matmul %14, %16, %cst_17 {dimension_numbers = #tpu.dot_dimension_numbers<[1], [0], [0], [1], [0, 0, 1, 1], [], []>} : vector<16x80xbf16>, vector<80x256xbf16>, vector<16x256xf32> -> vector<16x256xf32>
    %18 = arith.addf %12, %17 : vector<16x256xf32>
    %c0_18 = arith.constant 0 : index
    %c3 = arith.constant 3 : index
    %c0_19 = arith.constant 0 : index
    %19 = vector.load %arg1[%c0_18, %c3, %c0_19] : memref<1x19x80xbf16, #tpu.memory_space<vmem>>, vector<1x16x80xbf16>
    %20 = vector.shape_cast %19 : vector<1x16x80xbf16> to vector<16x80xbf16>
    %c3_20 = arith.constant 3 : index
    %c0_21 = arith.constant 0 : index
    %c0_22 = arith.constant 0 : index
    %21 = vector.load %arg2[%c3_20, %c0_21, %c0_22] : memref<4x80x256xbf16, #tpu.memory_space<vmem>>, vector<1x80x256xbf16>
    %22 = vector.shape_cast %21 : vector<1x80x256xbf16> to vector<80x256xbf16>
    %cst_23 = arith.constant dense<0.000000e+00> : vector<16x256xf32>
    %23 = tpu.matmul %20, %22, %cst_23 {dimension_numbers = #tpu.dot_dimension_numbers<[1], [0], [0], [1], [0, 0, 1, 1], [], []>} : vector<16x80xbf16>, vector<80x256xbf16>, vector<16x256xf32> -> vector<16x256xf32>
    %24 = arith.addf %18, %23 : vector<16x256xf32>
    %c0_24 = arith.constant 0 : index
    %c0_25 = arith.constant 0 : index
    %25 = vector.load %arg3[%c0_24, %c0_25] : memref<1x256xf32, #tpu.memory_space<vmem>>, vector<1x256xf32>
    %26 = vector.broadcast %25 : vector<1x256xf32> to vector<16x256xf32>
    %27 = arith.addf %24, %26 : vector<16x256xf32>
    %c0_26 = arith.constant 0 : index
    %c0_27 = arith.constant 0 : index
    %28 = vector.load %arg4[%c0_26, %c0_27] : memref<16x256xf32, #tpu.memory_space<vmem>>, vector<16x256xf32>
    tpu.vector_store %arg4[%c0_26, %c0_27], %27 {strides = array<i32>} : memref<16x256xf32, #tpu.memory_space<vmem>>, vector<16x256xf32>,
    return
  }
  func.func @transform_0(%arg0: i32) -> (i32, i32, i32) {
    %c0_i32 = arith.constant 0 : i32
    %c0_i32_0 = arith.constant 0 : i32
    %c0_i32_1 = arith.constant 0 : i32
    return %arg0, %c0_i32, %c0_i32_0 : i32, i32, i32
  }
  func.func @transform_1(%arg0: i32) -> (i32, i32, i32) {
    %c0_i32 = arith.constant 0 : i32
    %c0_i32_0 = arith.constant 0 : i32
    %c0_i32_1 = arith.constant 0 : i32
    %c0_i32_2 = arith.constant 0 : i32
    return %c0_i32, %c0_i32_0, %c0_i32_1 : i32, i32, i32
  }
  func.func @transform_2(%arg0: i32) -> (i32, i32) {
    %c0_i32 = arith.constant 0 : i32
    %c0_i32_0 = arith.constant 0 : i32
    %c0_i32_1 = arith.constant 0 : i32
    return %c0_i32, %c0_i32_0 : i32, i32
  }
  func.func @transform_3(%arg0: i32) -> (i32, i32) {
    %c0_i32 = arith.constant 0 : i32
    %c0_i32_0 = arith.constant 0 : i32
    return %arg0, %c0_i32 : i32, i32
  }
}

</mosaic_0001>

<llo_original>
// kernel: _lambda_.1
$region0: #{_lambda_.1}
  #allocation0 [shape = 'u32[]', space=smem, size = 0x4, offset = 0x4, fixed_abs, tag = 'smem constant byte address 0x4 - core index']
  #allocation1 [shape = 'u32[144,128]{1,0:T(1,128)}', space=vmem, size = 0x12000, scoped, tag = 'internal scratch']
  %s0 = inlined_call_operand.vmem [shape: bf16[2,19,80], index: 0, kind: input, shape index: {}]
  %s1 = inlined_call_operand.vmem [shape: bf16[4,80,256], index: 1, kind: input, shape index: {}]
  %s2 = inlined_call_operand.vmem [shape: f32[1,256], index: 2, kind: input, shape index: {}]
  %s3 = inlined_call_operand.vmem [shape: f32[32,256], index: 3, kind: output, shape index: {}]
  %s4 = sld [smem:[#allocation0]]
  $region45: #{_lambda_.1} parent=0
    _
  %s6 = ssub.s32 1, %s4
  %s7 = scalar_select 0, %s6, %s4
  loop: start=0, step=1, limit=4
  $region2: #{_lambda_.1} parent=0 // loop_pre_header
    _
  $region3: #{_lambda_.1} parent=0 // loop_header
    %s9 = sphi 0, %s13
    %p10 = scmp.ge.s32.totalorder %s9, 4
    %s19 = sphi 0, %s21
    %s22 = sphi 0, %s19
    %s23 = sphi 0, %s22
    %s39 = sphi 0, %s23
    %s43 = sphi 0, %s43
    %s45 = sphi 0, %s43
    %s46 = sphi 0, %s45
    %s60 = sphi 0, %s46
    %s64 = sphi 0, %s64
    %s66 = sphi 0, %s64
    %s67 = sphi 0, %s66
    %s81 = sphi 0, %s67
    %s87 = sphi 0, %s89
    %s90 = sphi 0, %s87
    %s91 = sphi 0, %s90
    %s107 = sphi 0, %s91
  $region4: #{_lambda_.1} parent=0 // loop_header_branch
    %12 = sbr.rel (%p10) target = $region8
  $region5: #{_lambda_.1} parent=0 // loop_body
    %s14 = ssub.s32 %s9, 1
    %s15 = ssub.s32 %s9, 2
    %s16 = sadd.s32 %s9, 1
    %s17 = ssub.s32 %s9, %s16
    %p18 = scmp.eq.s32.totalorder %s17, 0
    %s20 = sadd.s32 %s19, 1
    %s21 = scalar_select %p18, %s19, %s20
    %p24 = pneg %p18
    %p25 = scmp.eq.s32.totalorder %s9, 1
    %p26 = por %p24, %p25
    %p27 = scmp.ne.s32.totalorder %s19, %s22
    %p28 = scmp.eq.s32.totalorder %s9, 0
    %p29 = por %p27, %p28
    %p30 = scmp.ne.s32.totalorder %s19, %s22
    %p31 = scmp.eq.s32.totalorder %s14, 1
    %p32 = por %p30, %p31
    %p33 = scmp.ne.s32.totalorder %s22, %s23
    %p34 = scmp.eq.s32.totalorder %s14, 0
    %p35 = por %p33, %p34
    %p36 = scmp.ne.s32.totalorder %s22, %s23
    %p37 = scmp.eq.s32.totalorder %s15, 1
    %p38 = por %p36, %p37
    %p40 = scmp.ne.s32.totalorder %s23, %s39
    %p41 = scmp.eq.s32.totalorder %s15, 0
    %p42 = por %p40, %p41
    %s44 = sadd.s32 %s43, 1
    %p47 = scmp.eq.s32.totalorder %s9, 1
    %p48 = scmp.ne.s32.totalorder %s43, %s45
    %p49 = scmp.eq.s32.totalorder %s9, 0
    %p50 = por %p48, %p49
    %p51 = scmp.ne.s32.totalorder %s43, %s45
    %p52 = scmp.eq.s32.totalorder %s14, 1
    %p53 = por %p51, %p52
    %p54 = scmp.ne.s32.totalorder %s45, %s46
    %p55 = scmp.eq.s32.totalorder %s14, 0
    %p56 = por %p54, %p55
    %p57 = scmp.ne.s32.totalorder %s45, %s46
    %p58 = scmp.eq.s32.totalorder %s15, 1
    %p59 = por %p57, %p58
    %p61 = scmp.ne.s32.totalorder %s46, %s60
    %p62 = scmp.eq.s32.totalorder %s15, 0
    %p63 = por %p61, %p62
    %s65 = sadd.s32 %s64, 1
    %p68 = scmp.eq.s32.totalorder %s9, 1
    %p69 = scmp.ne.s32.totalorder %s64, %s66
    %p70 = scmp.eq.s32.totalorder %s9, 0
    %p71 = por %p69, %p70
    %p72 = scmp.ne.s32.totalorder %s64, %s66
    %p73 = scmp.eq.s32.totalorder %s14, 1
    %p74 = por %p72, %p73
    %p75 = scmp.ne.s32.totalorder %s66, %s67
    %p76 = scmp.eq.s32.totalorder %s14, 0
    %p77 = por %p75, %p76
    %p78 = scmp.ne.s32.totalorder %s66, %s67
    %p79 = scmp.eq.s32.totalorder %s15, 1
    %p80 = por %p78, %p79
    %p82 = scmp.ne.s32.totalorder %s67, %s81
    %p83 = scmp.eq.s32.totalorder %s15, 0
    %p84 = por %p82, %p83
    %s85 = ssub.s32 %s9, %s16
    %p86 = scmp.eq.s32.totalorder %s85, 0
    %s88 = sadd.s32 %s87, 1
    %s89 = scalar_select %p86, %s87, %s88
    %p92 = pneg %p86
    %p93 = scmp.eq.s32.totalorder %s9, 1
    %p94 = por %p92, %p93
    %p95 = scmp.ne.s32.totalorder %s87, %s90
    %p96 = scmp.eq.s32.totalorder %s9, 0
    %p97 = por %p95, %p96
    %p98 = scmp.ne.s32.totalorder %s87, %s90
    %p99 = scmp.eq.s32.totalorder %s14, 1
    %p100 = por %p98, %p99
    %p101 = scmp.ne.s32.totalorder %s90, %s91
    %p102 = scmp.eq.s32.totalorder %s14, 0
    %p103 = por %p101, %p102
    %p104 = scmp.ne.s32.totalorder %s90, %s91
    %p105 = scmp.eq.s32.totalorder %s15, 1
    %p106 = por %p104, %p105
    %p108 = scmp.ne.s32.totalorder %s91, %s107
    %p109 = scmp.eq.s32.totalorder %s15, 0
    %p110 = por %p108, %p109
    %p111 = scmp.le.s32.totalorder 1, %s9
    %p112 = scmp.lt.s32.totalorder %s9, 3
    %p113 = pnand %p111, %p112
    %p114 = pneg %p113
    // Predicated region
    $region9: #{_lambda_.1} parent=5 // pred_check
      _
    $region10: #{_lambda_.1} parent=5 // pred_check_branch
      %116 = sbr.rel (%p113) target = $region12
    $region11: #{_lambda_.1} parent=5 // pred_region
      %s117 = ssub.s32 %s9, 1
      // Predicated region
      $region13: #{_lambda_.1} parent=11 // pred_check
        %p118 = pneg %p56
      $region14: #{_lambda_.1} parent=11 // pred_check_branch
        %120 = sbr.rel (%p118) target = $region16
      $region15: #{_lambda_.1} parent=11 // pred_region
        _
      $region16: #{_lambda_.1} parent=11 // pred_fallthru
        _
      // Predicated region
      $region17: #{_lambda_.1} parent=11 // pred_check
        %p121 = pneg %p77
      $region18: #{_lambda_.1} parent=11 // pred_check_branch
        %123 = sbr.rel (%p121) target = $region20
      $region19: #{_lambda_.1} parent=11 // pred_region
        _
      $region20: #{_lambda_.1} parent=11 // pred_fallthru
        _
    $region12: #{_lambda_.1} parent=5 // pred_fallthru
      _
    %p124 = scmp.lt.s32.totalorder %s9, 2
    // Predicated region
    $region21: #{_lambda_.1} parent=5 // pred_check
      %p125 = pneg %p124
    $region22: #{_lambda_.1} parent=5 // pred_check_branch
      %127 = sbr.rel (%p125) target = $region24
    $region23: #{_lambda_.1} parent=5 // pred_region
      // Predicated region
      $region25: #{_lambda_.1} parent=23 // pred_check
        %p128 = pneg %p29
      $region26: #{_lambda_.1} parent=23 // pred_check_branch
        %130 = sbr.rel (%p128) target = $region28
      $region27: #{_lambda_.1} parent=23 // pred_region
        %p131 = scmp.lt.s32.totalorder %s9, 1
        %s132 = scalar_select %p131, %s9, 1
        %s133 = smul.addr %s132, 3
        %s134 = smul.addr %s133, 4
        %s135 = scalar_lea.vmem %s0, %s134
      $region28: #{_lambda_.1} parent=23 // pred_fallthru
        _
    $region24: #{_lambda_.1} parent=5 // pred_fallthru
      _
    %p136 = scmp.le.s32.totalorder 1, %s9
    %p137 = scmp.lt.s32.totalorder %s9, 3
    %p138 = pnand %p136, %p137
    %p139 = pneg %p138
    // Predicated region
    $region29: #{_lambda_.1} parent=5 // pred_check
      _
    $region30: #{_lambda_.1} parent=5 // pred_check_branch
      %141 = sbr.rel (%p138) target = $region32
    $region31: #{_lambda_.1} parent=5 // pred_region
      %s142 = ssub.s32 %s9, 1
      %p143 = scmp.lt.s32.totalorder %s14, 1
      %s144 = scalar_select %p143, %s14, 1
      %s145 = smul.addr %s144, 3
      %s146 = smul.addr %s145, 4
      %s147 = scalar_lea.vmem %s0, %s146
      %p148 = pneg %p35
      %p149 = pneg %p32
      %p150 = pneg %p56
      %p151 = pneg %p53
      %p152 = pneg %p77
      %p153 = pneg %p74
      %p154 = pneg %p103
      %p155 = pneg %p100
      %s156 = smul.u32 2, %s14
      %p157 = scmp.lt.s32.totalorder %s156, 3
      %s158 = scalar_select %p157, %s156, 3
      %s159 = smul.addr %s158, 2
      %s160 = smul.addr %s159, 8
      %s161 = scalar_lea.vmem %s3, %s160
      %p162 = scmp.lt.s32.totalorder %s14, 1
      %s163 = scalar_select %p162, %s14, 1
      %s164 = smul.addr %s163, 3
      %s165 = smul.addr %s164, 4
      %s166 = scalar_lea.vmem %s0, %s165
      %s167 = smul.u32 2, %s14
      %p168 = scmp.lt.s32.totalorder %s167, 3
      %s169 = scalar_select %p168, %s167, 3
      %s170 = smul.addr %s169, 2
      %s171 = smul.addr %s170, 8
      %s172 = scalar_lea.vmem %s3, %s171
      %s173 = smul.u32 2, %s14
      %v175 = vld [vmem:[%s166] sm:$0xf]
      %v176 = vld [vmem:[%s166 + $0x4] sm:$0xf]
      %v177 = vld [vmem:[%s1] sm:$0xff]
      %v178 = vld [vmem:[%s1 + $0x8] sm:$0xff]
      %v179 = vld [vmem:[%s1 + $0x10] sm:$0xff]
      %v180 = vld [vmem:[%s1 + $0x18] sm:$0xff]
      %v181 = vld [vmem:[%s1 + $0x20] sm:$0xff]
      %v182 = vld [vmem:[%s1 + $0x28] sm:$0xff]
      %v183 = vld [vmem:[%s1 + $0x30] sm:$0xff]
      %v184 = vld [vmem:[%s1 + $0x38] sm:$0xff]
      %v185 = vld [vmem:[%s1 + $0x40] sm:$0xff]
      %v186 = vld [vmem:[%s1 + $0x48] sm:$0xff]
      %v187 = vld [vmem:[%s166 + $0x8] sm:$0x1]
      %s188 = scalar_lea.vmem %s1, 80
      %v189 = vld [vmem:[%s188] sm:$0xff]
      %v190 = vld [vmem:[%s188 + $0x8] sm:$0xff]
      %v191 = vld [vmem:[%s188 + $0x10] sm:$0xff]
      %v192 = vld [vmem:[%s188 + $0x18] sm:$0xff]
      %v193 = vld [vmem:[%s188 + $0x20] sm:$0xff]
      %v194 = vld [vmem:[%s188 + $0x28] sm:$0xff]
      %v195 = vld [vmem:[%s188 + $0x30] sm:$0xff]
      %v196 = vld [vmem:[%s188 + $0x38] sm:$0xff]
      %v197 = vld [vmem:[%s188 + $0x40] sm:$0xff]
      %v198 = vld [vmem:[%s188 + $0x48] sm:$0xff]
      %v202 = vunpack.c.l.b16 %v175
      %v203 = vunpack.c.l.b16 %v176
      %v204 = vunpack.c.l.b16 %v187
      %v205 = vpack.c.b16 %v203, %v202
      %v206 = vpack.c.b16 %v204, %v204
      %vm207 = vsmask.f32 7424
      %v209 = vshrl.u32 %v205, 16
      %v211 = vshll.u32 %v205, 16
      %v213 = vrot.slane %v211, 1
      %v214 = vor.u32 %v209, %v213
      %v216 = vshll.u32 %v206, 16
      %v218 = vrot.slane %v216, 1
      %v219 = vsel %vm207, %v214, %v218
      %v230 = vunpack.c.l.b16 %v189
      %v231 = vunpack.c.h.b16 %v189
      %v232 = vunpack.c.l.b16 %v190
      %v233 = vunpack.c.h.b16 %v190
      %v234 = vunpack.c.l.b16 %v191
      %v235 = vunpack.c.h.b16 %v191
      %v236 = vunpack.c.l.b16 %v192
      %v237 = vunpack.c.h.b16 %v192
      %v238 = vunpack.c.l.b16 %v193
      %v239 = vunpack.c.h.b16 %v193
      %v240 = vunpack.c.l.b16 %v194
      %v241 = vunpack.c.h.b16 %v194
      %v242 = vunpack.c.l.b16 %v195
      %v243 = vunpack.c.h.b16 %v195
      %v244 = vunpack.c.l.b16 %v196
      %v245 = vunpack.c.h.b16 %v196
      %v246 = vunpack.c.l.b16 %v197
      %v247 = vunpack.c.h.b16 %v197
      %v248 = vunpack.c.l.b16 %v198
      %v249 = vunpack.c.h.b16 %v198
      %v250 = vpack.c.b16 %v232, %v230
      %v251 = vpack.c.b16 %v233, %v231
      %v252 = vpack.c.b16 %v236, %v234
      %v253 = vpack.c.b16 %v237, %v235
      %v254 = vpack.c.b16 %v240, %v238
      %v255 = vpack.c.b16 %v241, %v239
      %v256 = vpack.c.b16 %v244, %v242
      %v257 = vpack.c.b16 %v245, %v243
      %v258 = vpack.c.b16 %v248, %v246
      %v259 = vpack.c.b16 %v249, %v247
      %vm270 = vcmask 654336
      %v272 = vsel %vm270, %v219, 0
      %274 = vmatprep.subr.bf16.mxu0 %v251
      %275 = vmatpush1.bf16.msra.mxu0 %v250
      %276 = vmatprep.subr.bf16.mxu0 %v253
      %277 = vmatpush1.bf16.msra.mxu0 %v252
      %278 = vmatprep.subr.bf16.mxu0 %v255
      %279 = vmatpush1.bf16.msra.mxu0 %v254
      %280 = vmatprep.subr.bf16.mxu0 %v257
      %281 = vmatpush1.bf16.msra.mxu0 %v256
      %282 = vmatprep.subr.bf16.mxu0 %v259
      %283 = vmatpush1.bf16.msra.mxu0 %v258
      %284 = vmatprep.subr.bf16.mxu0 0
      %285 = vmatpush1.bf16.msra.mxu0 0
      %286 = vmatprep.subr.bf16.mxu0 0
      %287 = vmatpush1.bf16.msra.mxu0 0
      %288 = vmatprep.subr.bf16.mxu0 0
      %289 = vmatpush1.bf16.msra.mxu0 0
      %290 = vmatprep.subr.bf16.mxu0 0
      %291 = vmatpush1.bf16.msra.mxu0 0
      %292 = vmatprep.subr.bf16.mxu0 0
      %293 = vmatpush1.bf16.msra.mxu0 0
      %294 = vmatprep.subr.bf16.mxu0 0
      %295 = vmatpush1.bf16.msra.mxu0 0
      %296 = vmatprep.subr.bf16.mxu0 0
      %297 = vmatpush1.bf16.msra.mxu0 0
      %298 = vmatprep.subr.bf16.mxu0 0
      %299 = vmatpush1.bf16.msra.mxu0 0
      %300 = vmatprep.subr.bf16.mxu0 0
      %301 = vmatpush1.bf16.msra.mxu0 0
      %302 = vmatprep.subr.bf16.mxu0 0
      %303 = vmatpush1.bf16.msra.mxu0 0
      %304 = vmatprep.subr.bf16.mxu0 0
      %305 = vmatpush1.bf16.msra.mxu0 0
      %306 = vmatprep.mubr.bf16.mxu0 0
      %307 = vmatmul.mubr.bf16.gmra.mrb[0].mxu0 %v272
      %v308 = vpop.f32.mrb[0].mxu0
      %v309 = vadd.f32 0.0, %v308
      %v310 = vpop.f32.mrb[0].mxu0
      %v311 = vadd.f32 0.0, %v310
      %v312 = vpop.f32.mrb[0].mxu0
      %v313 = vadd.f32 0.0, %v312
      %v314 = vpop.f32.mrb[0].mxu0
      %v315 = vadd.f32 0.0, %v314
      %316 = vdwg.mxu0
      %v327 = vunpack.c.l.b16 %v177
      %v328 = vunpack.c.h.b16 %v177
      %v329 = vunpack.c.l.b16 %v178
      %v330 = vunpack.c.h.b16 %v178
      %v331 = vunpack.c.l.b16 %v179
      %v332 = vunpack.c.h.b16 %v179
      %v333 = vunpack.c.l.b16 %v180
      %v334 = vunpack.c.h.b16 %v180
      %v335 = vunpack.c.l.b16 %v181
      %v336 = vunpack.c.h.b16 %v181
      %v337 = vunpack.c.l.b16 %v182
      %v338 = vunpack.c.h.b16 %v182
      %v339 = vunpack.c.l.b16 %v183
      %v340 = vunpack.c.h.b16 %v183
      %v341 = vunpack.c.l.b16 %v184
      %v342 = vunpack.c.h.b16 %v184
      %v343 = vunpack.c.l.b16 %v185
      %v344 = vunpack.c.h.b16 %v185
      %v345 = vunpack.c.l.b16 %v186
      %v346 = vunpack.c.h.b16 %v186
      %v347 = vpack.c.b16 %v329, %v327
      %v348 = vpack.c.b16 %v330, %v328
      %v349 = vpack.c.b16 %v333, %v331
      %v350 = vpack.c.b16 %v334, %v332
      %v351 = vpack.c.b16 %v337, %v335
      %v352 = vpack.c.b16 %v338, %v336
      %v353 = vpack.c.b16 %v341, %v339
      %v354 = vpack.c.b16 %v342, %v340
      %v355 = vpack.c.b16 %v345, %v343
      %v356 = vpack.c.b16 %v346, %v344
      %v367 = vsel %vm270, %v205, 0
      %369 = vmatprep.subr.bf16.mxu0 %v348
      %370 = vmatpush1.bf16.msra.mxu0 %v347
      %371 = vmatprep.subr.bf16.mxu0 %v350
      %372 = vmatpush1.bf16.msra.mxu0 %v349
      %373 = vmatprep.subr.bf16.mxu0 %v352
      %374 = vmatpush1.bf16.msra.mxu0 %v351
      %375 = vmatprep.subr.bf16.mxu0 %v354
      %376 = vmatpush1.bf16.msra.mxu0 %v353
      %377 = vmatprep.subr.bf16.mxu0 %v356
      %378 = vmatpush1.bf16.msra.mxu0 %v355
      %379 = vmatprep.subr.bf16.mxu0 0
      %380 = vmatpush1.bf16.msra.mxu0 0
      %381 = vmatprep.subr.bf16.mxu0 0
      %382 = vmatpush1.bf16.msra.mxu0 0
      %383 = vmatprep.subr.bf16.mxu0 0
      %384 = vmatpush1.bf16.msra.mxu0 0
      %385 = vmatprep.subr.bf16.mxu0 0
      %386 = vmatpush1.bf16.msra.mxu0 0
      %387 = vmatprep.subr.bf16.mxu0 0
      %388 = vmatpush1.bf16.msra.mxu0 0
      %389 = vmatprep.subr.bf16.mxu0 0
      %390 = vmatpush1.bf16.msra.mxu0 0
      %391 = vmatprep.subr.bf16.mxu0 0
      %392 = vmatpush1.bf16.msra.mxu0 0
      %393 = vmatprep.subr.bf16.mxu0 0
      %394 = vmatpush1.bf16.msra.mxu0 0
      %395 = vmatprep.subr.bf16.mxu0 0
      %396 = vmatpush1.bf16.msra.mxu0 0
      %397 = vmatprep.subr.bf16.mxu0 0
      %398 = vmatpush1.bf16.msra.mxu0 0
      %399 = vmatprep.subr.bf16.mxu0 0
      %400 = vmatpush1.bf16.msra.mxu0 0
      %401 = vmatprep.mubr.bf16.mxu0 0
      %402 = vmatmul.mubr.bf16.gmra.mrb[0].mxu0 %v367
      %v403 = vpop.f32.mrb[0].mxu0
      %v404 = vadd.f32 %v309, %v403
      %v405 = vpop.f32.mrb[0].mxu0
      %v406 = vadd.f32 %v311, %v405
      %v407 = vpop.f32.mrb[0].mxu0
      %v408 = vadd.f32 %v313, %v407
      %v409 = vpop.f32.mrb[0].mxu0
      %v410 = vadd.f32 %v315, %v409
      %411 = vdwg.mxu0
      %v412 = vld [vmem:[%s166] sm:$0xe]
      %s413 = scalar_lea.vmem %s1, 160
      %v414 = vld [vmem:[%s413] sm:$0xff]
      %v415 = vld [vmem:[%s413 + $0x8] sm:$0xff]
      %v416 = vld [vmem:[%s413 + $0x10] sm:$0xff]
      %v417 = vld [vmem:[%s413 + $0x18] sm:$0xff]
      %v418 = vld [vmem:[%s413 + $0x20] sm:$0xff]
      %v419 = vld [vmem:[%s413 + $0x28] sm:$0xff]
      %v420 = vld [vmem:[%s413 + $0x30] sm:$0xff]
      %v421 = vld [vmem:[%s413 + $0x38] sm:$0xff]
      %v422 = vld [vmem:[%s413 + $0x40] sm:$0xff]
      %v423 = vld [vmem:[%s413 + $0x48] sm:$0xff]
      %v425 = vunpack.c.l.b16 %v412
      %v426 = vpack.c.b16 %v203, %v425
      %vm427 = vcmask 1046528
      %v428 = vrot.slane %v426, 1
      %v429 = vrot.slane %v206, 1
      %v430 = vsel %vm427, %v428, %v429
      %v441 = vunpack.c.l.b16 %v414
      %v442 = vunpack.c.h.b16 %v414
      %v443 = vunpack.c.l.b16 %v415
      %v444 = vunpack.c.h.b16 %v415
      %v445 = vunpack.c.l.b16 %v416
      %v446 = vunpack.c.h.b16 %v416
      %v447 = vunpack.c.l.b16 %v417
      %v448 = vunpack.c.h.b16 %v417
      %v449 = vunpack.c.l.b16 %v418
      %v450 = vunpack.c.h.b16 %v418
      %v451 = vunpack.c.l.b16 %v419
      %v452 = vunpack.c.h.b16 %v419
      %v453 = vunpack.c.l.b16 %v420
      %v454 = vunpack.c.h.b16 %v420
      %v455 = vunpack.c.l.b16 %v421
      %v456 = vunpack.c.h.b16 %v421
      %v457 = vunpack.c.l.b16 %v422
      %v458 = vunpack.c.h.b16 %v422
      %v459 = vunpack.c.l.b16 %v423
      %v460 = vunpack.c.h.b16 %v423
      %v461 = vpack.c.b16 %v443, %v441
      %v462 = vpack.c.b16 %v444, %v442
      %v463 = vpack.c.b16 %v447, %v445
      %v464 = vpack.c.b16 %v448, %v446
      %v465 = vpack.c.b16 %v451, %v449
      %v466 = vpack.c.b16 %v452, %v450
      %v467 = vpack.c.b16 %v455, %v453
      %v468 = vpack.c.b16 %v456, %v454
      %v469 = vpack.c.b16 %v459, %v457
      %v470 = vpack.c.b16 %v460, %v458
      %v482 = vsel %vm270, %v430, 0
      %484 = vmatprep.subr.bf16.mxu0 %v462
      %485 = vmatpush1.bf16.msra.mxu0 %v461
      %486 = vmatprep.subr.bf16.mxu0 %v464
      %487 = vmatpush1.bf16.msra.mxu0 %v463
      %488 = vmatprep.subr.bf16.mxu0 %v466
      %489 = vmatpush1.bf16.msra.mxu0 %v465
      %490 = vmatprep.subr.bf16.mxu0 %v468
      %491 = vmatpush1.bf16.msra.mxu0 %v467
      %492 = vmatprep.subr.bf16.mxu0 %v470
      %493 = vmatpush1.bf16.msra.mxu0 %v469
      %494 = vmatprep.subr.bf16.mxu0 0
      %495 = vmatpush1.bf16.msra.mxu0 0
      %496 = vmatprep.subr.bf16.mxu0 0
      %497 = vmatpush1.bf16.msra.mxu0 0
      %498 = vmatprep.subr.bf16.mxu0 0
      %499 = vmatpush1.bf16.msra.mxu0 0
      %500 = vmatprep.subr.bf16.mxu0 0
      %501 = vmatpush1.bf16.msra.mxu0 0
      %502 = vmatprep.subr.bf16.mxu0 0
      %503 = vmatpush1.bf16.msra.mxu0 0
      %504 = vmatprep.subr.bf16.mxu0 0
      %505 = vmatpush1.bf16.msra.mxu0 0
      %506 = vmatprep.subr.bf16.mxu0 0
      %507 = vmatpush1.bf16.msra.mxu0 0
      %508 = vmatprep.subr.bf16.mxu0 0
      %509 = vmatpush1.bf16.msra.mxu0 0
      %510 = vmatprep.subr.bf16.mxu0 0
      %511 = vmatpush1.bf16.msra.mxu0 0
      %512 = vmatprep.subr.bf16.mxu0 0
      %513 = vmatpush1.bf16.msra.mxu0 0
      %514 = vmatprep.subr.bf16.mxu0 0
      %515 = vmatpush1.bf16.msra.mxu0 0
      %516 = vmatprep.mubr.bf16.mxu0 0
      %517 = vmatmul.mubr.bf16.gmra.mrb[0].mxu0 %v482
      %v518 = vpop.f32.mrb[0].mxu0
      %v519 = vadd.f32 0.0, %v518
      %v520 = vpop.f32.mrb[0].mxu0
      %v521 = vadd.f32 0.0, %v520
      %v522 = vpop.f32.mrb[0].mxu0
      %v523 = vadd.f32 0.0, %v522
      %v524 = vpop.f32.mrb[0].mxu0
      %v525 = vadd.f32 0.0, %v524
      %526 = vdwg.mxu0
      %v527 = vadd.f32 %v404, %v519
      %v528 = vadd.f32 %v406, %v521
      %v529 = vadd.f32 %v408, %v523
      %v530 = vadd.f32 %v410, %v525
      %v531 = vld [vmem:[%s166 + $0x8] sm:$0x3]
      %s532 = scalar_lea.vmem %s1, 240
      %v533 = vld [vmem:[%s532] sm:$0xff]
      %v534 = vld [vmem:[%s532 + $0x8] sm:$0xff]
      %v535 = vld [vmem:[%s532 + $0x10] sm:$0xff]
      %v536 = vld [vmem:[%s532 + $0x18] sm:$0xff]
      %v537 = vld [vmem:[%s532 + $0x20] sm:$0xff]
      %v538 = vld [vmem:[%s532 + $0x28] sm:$0xff]
      %v539 = vld [vmem:[%s532 + $0x30] sm:$0xff]
      %v540 = vld [vmem:[%s532 + $0x38] sm:$0xff]
      %v541 = vld [vmem:[%s532 + $0x40] sm:$0xff]
      %v542 = vld [vmem:[%s532 + $0x48] sm:$0xff]
      %v544 = vunpack.c.l.b16 %v531
      %v545 = vpack.c.b16 %v544, %v544
      %vm546 = vsmask.f32 6400
      %v548 = vshrl.u32 %v426, 16
      %v550 = vrot.slane %v548, 1
      %v551 = vshll.u32 %v426, 16
      %v553 = vrot.slane %v551, 2
      %v554 = vor.u32 %v550, %v553
      %v556 = vshrl.u32 %v545, 16
      %v558 = vrot.slane %v556, 1
      %v559 = vshll.u32 %v545, 16
      %v561 = vrot.slane %v559, 2
      %v562 = vor.u32 %v558, %v561
      %v563 = vsel %vm546, %v554, %v562
      %v574 = vunpack.c.l.b16 %v533
      %v575 = vunpack.c.h.b16 %v533
      %v576 = vunpack.c.l.b16 %v534
      %v577 = vunpack.c.h.b16 %v534
      %v578 = vunpack.c.l.b16 %v535
      %v579 = vunpack.c.h.b16 %v535
      %v580 = vunpack.c.l.b16 %v536
      %v581 = vunpack.c.h.b16 %v536
      %v582 = vunpack.c.l.b16 %v537
      %v583 = vunpack.c.h.b16 %v537
      %v584 = vunpack.c.l.b16 %v538
      %v585 = vunpack.c.h.b16 %v538
      %v586 = vunpack.c.l.b16 %v539
      %v587 = vunpack.c.h.b16 %v539
      %v588 = vunpack.c.l.b16 %v540
      %v589 = vunpack.c.h.b16 %v540
      %v590 = vunpack.c.l.b16 %v541
      %v591 = vunpack.c.h.b16 %v541
      %v592 = vunpack.c.l.b16 %v542
      %v593 = vunpack.c.h.b16 %v542
      %v594 = vpack.c.b16 %v576, %v574
      %v595 = vpack.c.b16 %v577, %v575
      %v596 = vpack.c.b16 %v580, %v578
      %v597 = vpack.c.b16 %v581, %v579
      %v598 = vpack.c.b16 %v584, %v582
      %v599 = vpack.c.b16 %v585, %v583
      %v600 = vpack.c.b16 %v588, %v586
      %v601 = vpack.c.b16 %v589, %v587
      %v602 = vpack.c.b16 %v592, %v590
      %v603 = vpack.c.b16 %v593, %v591
      %v615 = vsel %vm270, %v563, 0
      %617 = vmatprep.subr.bf16.mxu0 %v595
      %618 = vmatpush1.bf16.msra.mxu0 %v594
      %619 = vmatprep.subr.bf16.mxu0 %v597
      %620 = vmatpush1.bf16.msra.mxu0 %v596
      %621 = vmatprep.subr.bf16.mxu0 %v599
      %622 = vmatpush1.bf16.msra.mxu0 %v598
      %623 = vmatprep.subr.bf16.mxu0 %v601
      %624 = vmatpush1.bf16.msra.mxu0 %v600
      %625 = vmatprep.subr.bf16.mxu0 %v603
      %626 = vmatpush1.bf16.msra.mxu0 %v602
      %627 = vmatprep.subr.bf16.mxu0 0
      %628 = vmatpush1.bf16.msra.mxu0 0
      %629 = vmatprep.subr.bf16.mxu0 0
      %630 = vmatpush1.bf16.msra.mxu0 0
      %631 = vmatprep.subr.bf16.mxu0 0
      %632 = vmatpush1.bf16.msra.mxu0 0
      %633 = vmatprep.subr.bf16.mxu0 0
      %634 = vmatpush1.bf16.msra.mxu0 0
      %635 = vmatprep.subr.bf16.mxu0 0
      %636 = vmatpush1.bf16.msra.mxu0 0
      %637 = vmatprep.subr.bf16.mxu0 0
      %638 = vmatpush1.bf16.msra.mxu0 0
      %639 = vmatprep.subr.bf16.mxu0 0
      %640 = vmatpush1.bf16.msra.mxu0 0
      %641 = vmatprep.subr.bf16.mxu0 0
      %642 = vmatpush1.bf16.msra.mxu0 0
      %643 = vmatprep.subr.bf16.mxu0 0
      %644 = vmatpush1.bf16.msra.mxu0 0
      %645 = vmatprep.subr.bf16.mxu0 0
      %646 = vmatpush1.bf16.msra.mxu0 0
      %647 = vmatprep.subr.bf16.mxu0 0
      %648 = vmatpush1.bf16.msra.mxu0 0
      %649 = vmatprep.mubr.bf16.mxu0 0
      %650 = vmatmul.mubr.bf16.gmra.mrb[0].mxu0 %v615
      %v651 = vpop.f32.mrb[0].mxu0
      %v652 = vadd.f32 0.0, %v651
      %v653 = vpop.f32.mrb[0].mxu0
      %v654 = vadd.f32 0.0, %v653
      %v655 = vpop.f32.mrb[0].mxu0
      %v656 = vadd.f32 0.0, %v655
      %v657 = vpop.f32.mrb[0].mxu0
      %v658 = vadd.f32 0.0, %v657
      %659 = vdwg.mxu0
      %v660 = vadd.f32 %v527, %v652
      %v661 = vadd.f32 %v528, %v654
      %v662 = vadd.f32 %v529, %v656
      %v663 = vadd.f32 %v530, %v658
      %v664 = vld [vmem:[%s2] sm:$0x3]
      %v666 = vlaneseq
      %v667 = vshrl.u32 %v666, 7
      %v668 = vsub.s32 0, %v667
      %v669 = vrot.slane %v664, %v668
      %v670 = vlaneseq
      %v671 = vshrl.u32 %v670, 7
      %v672 = vsub.s32 1, %v671
      %v673 = vrot.slane %v664, %v672
      %v676 = vadd.f32 %v660, %v669
      %v677 = vadd.f32 %v661, %v673
      %v678 = vadd.f32 %v662, %v669
      %v679 = vadd.f32 %v663, %v673
      %680 = vst [vmem:[%s172] sm:$0xff] %v676
      %681 = vst [vmem:[%s172 + $0x8] sm:$0xff] %v677
      %682 = vst [vmem:[%s172 + $0x10] sm:$0xff] %v678
      %683 = vst [vmem:[%s172 + $0x18] sm:$0xff] %v679
      %s684 = smul.u32 2, %s14
      %p685 = scmp.lt.s32.totalorder %s684, 3
      %s686 = scalar_select %p685, %s684, 3
      %s687 = smul.addr %s686, 2
      %s688 = smul.addr %s687, 8
      %s689 = scalar_lea.vmem %s3, %s688
      // Predicated region
      $region33: #{_lambda_.1} parent=31 // pred_check
        %p690 = pneg %p100
      $region34: #{_lambda_.1} parent=31 // pred_check_branch
        %692 = sbr.rel (%p690) target = $region36
      $region35: #{_lambda_.1} parent=31 // pred_region
        %s693 = smul.u32 2, %s14
      $region36: #{_lambda_.1} parent=31 // pred_fallthru
        _
    $region32: #{_lambda_.1} parent=5 // pred_fallthru
      _
    %p694 = scmp.le.s32.totalorder 2, %s9
    // Predicated region
    $region37: #{_lambda_.1} parent=5 // pred_check
      %p695 = pneg %p694
    $region38: #{_lambda_.1} parent=5 // pred_check_branch
      %697 = sbr.rel (%p695) target = $region40
    $region39: #{_lambda_.1} parent=5 // pred_region
      %s698 = ssub.s32 %s9, 2
      // Predicated region
      $region41: #{_lambda_.1} parent=39 // pred_check
        %p699 = pneg %p106
      $region42: #{_lambda_.1} parent=39 // pred_check_branch
        %701 = sbr.rel (%p699) target = $region44
      $region43: #{_lambda_.1} parent=39 // pred_region
        %s702 = smul.u32 2, %s15
        %p703 = scmp.lt.s32.totalorder %s702, 3
        %s704 = scalar_select %p703, %s702, 3
        %s705 = smul.addr %s704, 2
        %s706 = smul.addr %s705, 8
        %s707 = scalar_lea.vmem %s3, %s706
      $region44: #{_lambda_.1} parent=39 // pred_fallthru
        _
    $region40: #{_lambda_.1} parent=5 // pred_fallthru
      _
  $region6: #{_lambda_.1} parent=0 // loop_footer
    %s13 = sadd.s32 1, %s9
  $region7: #{_lambda_.1} parent=0 // loop_footer_branch
    %8 = sbr.rel target = $region3
  $region8: #{_lambda_.1} parent=0 // loop_exit
    _

</llo_original>
